<compile_context>
chip_gen: v5e
topology: v5e:2x2
jax: 0.10.0
libtpu: 0.0.40
codegen_flags: <defaults>
</compile_context>

<pallas_src>
import jax
import jax.numpy as jnp
from jax.experimental import pallas as pl
from jax.experimental.pallas import tpu as pltpu

LANES = 128
# 4096 x 128 x 4 B = 2 MiB per f32 input block; 2 inputs x 2 buffers = 8 MiB.
# Fits the default scoped-VMEM limit on all of v5e (16 MiB), v6e / v7x (32 MiB).
MAX_ROW_TILE = 4096


def _sublane_align(dtype) -> int:
    # Minimum sublane tile: 8 for 32-bit, 16 for 16-bit, 32 for 8-bit dtypes.
    itemsize = jnp.dtype(dtype).itemsize
    return max(8, 32 // itemsize)


def _make_loss_kernel(beta: float, row_tile: int, rows_main: int,
                      steps_per_core: int, needs_mask: bool):
    beta = float(beta)
    nfold = row_tile // 8  # row_tile is always a multiple of 8

    def loss_kernel(pred_ref, targ_ref, out_sq_ref, out_pen_ref):
        c = pl.program_id(0)   # TensorCore split (parallel)
        i = pl.program_id(1)   # row-tile stream (arbitrary / reduction)

        @pl.when(i == 0)
        def _():
            out_sq_ref[...] = jnp.zeros_like(out_sq_ref)
            out_pen_ref[...] = jnp.zeros_like(out_pen_ref)

        p = pred_ref[...]
        t = targ_ref[...]
        if p.dtype != jnp.float32:
            p = p.astype(jnp.float32)
        if t.dtype != jnp.float32:
            t = t.astype(jnp.float32)
        d = p - t
        dd = d * d
        pen = jnp.maximum(d + beta, 0.0)

        if needs_mask:
            # Mask rows beyond the logical row count: covers the partial last
            # block and any duplicated (index-clamped) block of the 2-core split.
            logical_block = c * steps_per_core + i
            row0 = logical_block * row_tile
            rows = row0 + jax.lax.broadcasted_iota(jnp.int32, (row_tile, LANES), 0)
            valid = rows < rows_main
            dd = jnp.where(valid, dd, 0.0)
            pen = jnp.where(valid, pen, 0.0)

        # Fold the (row_tile, 128) tile into the resident (8, 128) accumulators
        # with VPU adds along the leading axis (no XLU, ~2 acc loads/stores).
        out_sq_ref[...] += dd.reshape(nfold, 8, LANES).sum(axis=0)
        out_pen_ref[...] += pen.reshape(nfold, 8, LANES).sum(axis=0)

    return loss_kernel


def custom_loss(y_pred, y_target, alpha: float = 1.0, beta: float = 0.01):
    """Pallas TPU implementation of:
        mean((y_pred - y_target)**2) + alpha * mean(relu(y_pred - y_target + beta))
    Accepts arbitrary shapes/dtypes; accumulates in f32; no full-array padding copies.
    """
    assert y_pred.shape == y_target.shape, "shapes must match"
    n_elems = int(y_pred.size)
    assert n_elems > 0, "empty input"
    alpha = float(alpha)
    beta = float(beta)

    flat_p = y_pred.reshape(-1)
    flat_t = y_target.reshape(-1)

    align = max(_sublane_align(y_pred.dtype), _sublane_align(y_target.dtype))
    rows_full = n_elems // LANES
    rows_main = (rows_full // align) * align       # rows handled by the kernel
    main_len = rows_main * LANES

    sq_total = jnp.float32(0.0)
    pen_total = jnp.float32(0.0)

    if rows_main > 0:
        if main_len == n_elems:
            # Common case: free reshape, zero extra HBM traffic.
            p2d = flat_p.reshape(rows_main, LANES)
            t2d = flat_t.reshape(rows_main, LANES)
        else:
            # Rare misaligned case: one prefix-slice per input (tail done in JAX).
            # TODO(synk): allow_input_fusion could fuse this slice into the kernel DMA.
            p2d = jax.lax.slice(flat_p, (0,), (main_len,)).reshape(rows_main, LANES)
            t2d = jax.lax.slice(flat_t, (0,), (main_len,)).reshape(rows_main, LANES)

        row_tile = rows_main if rows_main <= MAX_ROW_TILE else MAX_ROW_TILE
        num_blocks = -(-rows_main // row_tile)
        # Split the row range across 2 TensorCores (v7x); harmless on 1-TC chips.
        split = 2 if num_blocks >= 2 else 1
        steps_per_core = -(-num_blocks // split)
        needs_mask = (split * steps_per_core * row_tile) != rows_main

        kernel = _make_loss_kernel(beta, row_tile, rows_main, steps_per_core, needs_mask)

        def in_map(c, i):
            # Clamp so duplicated/out-of-range blocks stay in bounds; their
            # contributions are masked to zero inside the kernel.
            return (jnp.minimum(c * steps_per_core + i, num_blocks - 1), 0)

        out_sq, out_pen = pl.pallas_call(
            kernel,
            out_shape=(
                jax.ShapeDtypeStruct((split * 8, LANES), jnp.float32),
                jax.ShapeDtypeStruct((split * 8, LANES), jnp.float32),
            ),
            grid_spec=pltpu.PrefetchScalarGridSpec(
                num_scalar_prefetch=0,
                grid=(split, steps_per_core),
                in_specs=[
                    pl.BlockSpec((row_tile, LANES), in_map),
                    pl.BlockSpec((row_tile, LANES), in_map),
                ],
                out_specs=[
                    pl.BlockSpec((8, LANES), lambda c, i: (c, 0)),
                    pl.BlockSpec((8, LANES), lambda c, i: (c, 0)),
                ],
            ),
            compiler_params=pltpu.CompilerParams(
                dimension_semantics=("parallel", "arbitrary"),
            ),
        )(p2d, t2d)

        sq_total = sq_total + jnp.sum(out_sq)
        pen_total = pen_total + jnp.sum(out_pen)

    if main_len < n_elems:
        # Tiny (< align*128 + 128 element) remainder: pure-JAX epilogue.
        tp = flat_p[main_len:].astype(jnp.float32)
        tt = flat_t[main_len:].astype(jnp.float32)
        td = tp - tt
        sq_total = sq_total + jnp.sum(td * td)
        pen_total = pen_total + jnp.sum(jnp.maximum(td + beta, 0.0))

    inv_n = 1.0 / float(n_elems)
    return sq_total * inv_n + alpha * (pen_total * inv_n)


def _ref_loss(y_pred, y_target, alpha, beta):
    d = y_pred.astype(jnp.float32) - y_target.astype(jnp.float32)
    return jnp.mean(d * d) + alpha * jnp.mean(jnp.maximum(d + beta, 0.0))


if __name__ == "__main__":
    key = jax.random.PRNGKey(0)
    k1, k2, k3, k4, k5, k6 = jax.random.split(key, 6)
    alpha, beta = 1.0, 0.01

    # 1) Small NCHW pair (multiple of 128 -> zero-copy, single-block path).
    B, C, H, W = 2, 4, 16, 16
    y_pred = jax.random.normal(k1, (B, C, H, W), dtype=jnp.float32)
    y_target = jax.random.normal(k2, (B, C, H, W), dtype=jnp.float32)
    loss = jax.block_until_ready(custom_loss(y_pred, y_target, alpha, beta))
    ref = _ref_loss(y_pred, y_target, alpha, beta)
    assert jnp.allclose(loss, ref, rtol=1e-5, atol=1e-6), (loss, ref)

    # 2) Odd size (exercises misaligned path + pure-JAX tail epilogue).
    xp = jax.random.normal(k3, (3, 5, 37, 41), dtype=jnp.float32)
    xt = jax.random.normal(k4, (3, 5, 37, 41), dtype=jnp.float32)
    loss2 = jax.block_until_ready(custom_loss(xp, xt, alpha, beta))
    ref2 = _ref_loss(xp, xt, alpha, beta)
    assert jnp.allclose(loss2, ref2, rtol=1e-5, atol=1e-6), (loss2, ref2)

    # 3) Multi-block size (exercises 2-way core split, clamped block + masking).
    zp = jax.random.normal(k5, (4, 8, 128, 160), dtype=jnp.float32)
    zt = jax.random.normal(k6, (4, 8, 128, 160), dtype=jnp.float32)
    loss3 = jax.block_until_ready(custom_loss(zp, zt, alpha, beta))
    ref3 = _ref_loss(zp, zt, alpha, beta)
    assert jnp.allclose(loss3, ref3, rtol=1e-4, atol=1e-6), (loss3, ref3)

    print("KERNEL_OK")
</pallas_src>

<mosaic_0001>
module attributes {stable_mosaic.version = 11 : i64} {
  func.func @loss_kernel(%arg0: i32, %arg1: i32, %arg2: memref<16x128xf32, #tpu.memory_space<vmem>>, %arg3: memref<16x128xf32, #tpu.memory_space<vmem>>, %arg4: memref<8x128xf32, #tpu.memory_space<vmem>>, %arg5: memref<8x128xf32, #tpu.memory_space<vmem>>) attributes {dimension_semantics = [#tpu.dimension_semantics<parallel>, #tpu.dimension_semantics<arbitrary>], iteration_bounds = array<i64: 1, 1>, scalar_prefetch = 0 : i64, scratch_operands = 0 : i64, tpu.core_type = #tpu.core_type<tc>, window_params = [{transform_indices = @transform_0, window_bounds = array<i64: 16, 128>}, {transform_indices = @transform_1, window_bounds = array<i64: 16, 128>}, {transform_indices = @transform_2, window_bounds = array<i64: 8, 128>}, {transform_indices = @transform_3, window_bounds = array<i64: 8, 128>}]} {
    %c0_i32 = arith.constant 0 : i32
    %0 = arith.cmpi eq, %arg1, %c0_i32 : i32
    %1 = arith.extui %0 : i1 to i32
    %c0_i32_0 = arith.constant 0 : i32
    %2 = arith.cmpi ne, %1, %c0_i32_0 : i32
    scf.if %2 {
      %cst_15 = arith.constant 0.000000e+00 : f32
      %21 = vector.broadcast %cst_15 : f32 to vector<8x128xf32>
      %c0_16 = arith.constant 0 : index
      %c0_17 = arith.constant 0 : index
      %22 = vector.load %arg4[%c0_16, %c0_17] : memref<8x128xf32, #tpu.memory_space<vmem>>, vector<8x128xf32>
      tpu.vector_store %arg4[%c0_16, %c0_17], %21 {strides = array<i32>} : memref<8x128xf32, #tpu.memory_space<vmem>>, vector<8x128xf32>,
      %cst_18 = arith.constant 0.000000e+00 : f32
      %23 = vector.broadcast %cst_18 : f32 to vector<8x128xf32>
      %c0_19 = arith.constant 0 : index
      %c0_20 = arith.constant 0 : index
      %24 = vector.load %arg5[%c0_19, %c0_20] : memref<8x128xf32, #tpu.memory_space<vmem>>, vector<8x128xf32>
      tpu.vector_store %arg5[%c0_19, %c0_20], %23 {strides = array<i32>} : memref<8x128xf32, #tpu.memory_space<vmem>>, vector<8x128xf32>,
    } else {
    }
    %c0 = arith.constant 0 : index
    %c0_1 = arith.constant 0 : index
    %3 = vector.load %arg2[%c0, %c0_1] : memref<16x128xf32, #tpu.memory_space<vmem>>, vector<16x128xf32>
    %c0_2 = arith.constant 0 : index
    %c0_3 = arith.constant 0 : index
    %4 = vector.load %arg3[%c0_2, %c0_3] : memref<16x128xf32, #tpu.memory_space<vmem>>, vector<16x128xf32>
    %5 = arith.subf %3, %4 : vector<16x128xf32>
    %6 = arith.mulf %5, %5 : vector<16x128xf32>
    %cst = arith.constant 0.00999999977 : f32
    %7 = vector.broadcast %cst : f32 to vector<16x128xf32>
    %8 = arith.addf %5, %7 : vector<16x128xf32>
    %cst_4 = arith.constant 0.000000e+00 : f32
    %9 = vector.broadcast %cst_4 : f32 to vector<16x128xf32>
    %10 = arith.maximumf %8, %9 : vector<16x128xf32>
    %c0_5 = arith.constant 0 : index
    %c0_6 = arith.constant 0 : index
    %11 = vector.load %arg4[%c0_5, %c0_6] : memref<8x128xf32, #tpu.memory_space<vmem>>, vector<8x128xf32>
    %12 = vector.shape_cast %6 : vector<16x128xf32> to vector<2x8x128xf32>
    %cst_7 = arith.constant dense<0.000000e+00> : vector<8x128xf32>
    %13 = vector.multi_reduction <add>, %12, %cst_7 [0] : vector<2x8x128xf32> to vector<8x128xf32>
    %14 = arith.addf %11, %13 : vector<8x128xf32>
    %c0_8 = arith.constant 0 : index
    %c0_9 = arith.constant 0 : index
    %15 = vector.load %arg4[%c0_8, %c0_9] : memref<8x128xf32, #tpu.memory_space<vmem>>, vector<8x128xf32>
    tpu.vector_store %arg4[%c0_8, %c0_9], %14 {strides = array<i32>} : memref<8x128xf32, #tpu.memory_space<vmem>>, vector<8x128xf32>,
    %c0_10 = arith.constant 0 : index
    %c0_11 = arith.constant 0 : index
    %16 = vector.load %arg5[%c0_10, %c0_11] : memref<8x128xf32, #tpu.memory_space<vmem>>, vector<8x128xf32>
    %17 = vector.shape_cast %10 : vector<16x128xf32> to vector<2x8x128xf32>
    %cst_12 = arith.constant dense<0.000000e+00> : vector<8x128xf32>
    %18 = vector.multi_reduction <add>, %17, %cst_12 [0] : vector<2x8x128xf32> to vector<8x128xf32>
    %19 = arith.addf %16, %18 : vector<8x128xf32>
    %c0_13 = arith.constant 0 : index
    %c0_14 = arith.constant 0 : index
    %20 = vector.load %arg5[%c0_13, %c0_14] : memref<8x128xf32, #tpu.memory_space<vmem>>, vector<8x128xf32>
    tpu.vector_store %arg5[%c0_13, %c0_14], %19 {strides = array<i32>} : memref<8x128xf32, #tpu.memory_space<vmem>>, vector<8x128xf32>,
    return
  }
  func.func @transform_0(%arg0: i32, %arg1: i32) -> (i32, i32) {
    %c1_i32 = arith.constant 1 : i32
    %0 = arith.muli %arg0, %c1_i32 : i32
    %1 = arith.addi %0, %arg1 : i32
    %c0_i32 = arith.constant 0 : i32
    %2 = arith.minsi %1, %c0_i32 : i32
    %c0_i32_0 = arith.constant 0 : i32
    %c0_i32_1 = arith.constant 0 : i32
    return %2, %c0_i32_0 : i32, i32
  }
  func.func @transform_1(%arg0: i32, %arg1: i32) -> (i32, i32) {
    %c1_i32 = arith.constant 1 : i32
    %0 = arith.muli %arg0, %c1_i32 : i32
    %1 = arith.addi %0, %arg1 : i32
    %c0_i32 = arith.constant 0 : i32
    %2 = arith.minsi %1, %c0_i32 : i32
    %c0_i32_0 = arith.constant 0 : i32
    %c0_i32_1 = arith.constant 0 : i32
    return %2, %c0_i32_0 : i32, i32
  }
  func.func @transform_2(%arg0: i32, %arg1: i32) -> (i32, i32) {
    %c0_i32 = arith.constant 0 : i32
    %c0_i32_0 = arith.constant 0 : i32
    return %arg0, %c0_i32 : i32, i32
  }
  func.func @transform_3(%arg0: i32, %arg1: i32) -> (i32, i32) {
    %c0_i32 = arith.constant 0 : i32
    %c0_i32_0 = arith.constant 0 : i32
    return %arg0, %c0_i32 : i32, i32
  }
}

</mosaic_0001>

<llo_original>
// kernel: tpu_custom_call.1
$region0: #{tpu_custom_call.1}
  #allocation0 [shape = 'u32[]', space=smem, size = 0x4, offset = 0x4, fixed_abs, tag = 'smem constant byte address 0x4 - core index']
  #allocation1 [shape = 'u32[72,128]{1,0:T(1,128)}', space=vmem, size = 0x9000, scoped, tag = 'internal scratch']
  %s0 = inlined_call_operand.hbm [shape: f32[16,128], index: 0, kind: input, shape index: {}]
  %s1 = inlined_call_operand.hbm [shape: f32[16,128], index: 1, kind: input, shape index: {}]
  %s2 = inlined_call_operand.hbm [shape: f32[8,128], index: 2, kind: output, shape index: {0}]
  %s3 = inlined_call_operand.hbm [shape: f32[8,128], index: 3, kind: output, shape index: {1}]
  %4 = xla_tuple %s2, %s3
  %s5 = sld [smem:[#allocation0]]
  $region38: #{tpu_custom_call.1} parent=0
    _
  %s7 = ssub.s32 1, %s5
  %s8 = scalar_select 0, %s7, %s5
  $region1: #{tpu_custom_call.1} parent=0
    #allocation2 [shape = 'u8[8192]{0}', space=vmem, size = 0x2000, scoped, tag = 'input window, operand 0, single buffered']
    #allocation3 [shape = 's32[1]{0}', space=sflag, size = 0x4, scoped, tag = 'scoped memory for tpu_custom_call.1']
    #allocation4 [shape = 's32[1]{0}', space=sflag, size = 0x4, scoped, tag = 'scoped memory for tpu_custom_call.1']
    #allocation5 [shape = 'u8[8192]{0}', space=vmem, size = 0x2000, scoped, tag = 'input window, operand 1, single buffered']
    #allocation6 [shape = 's32[1]{0}', space=sflag, size = 0x4, scoped, tag = 'scoped memory for tpu_custom_call.1']
    #allocation7 [shape = 'u8[4096]{0}', space=vmem, size = 0x1000, scoped, tag = 'output window, operand 0, single buffered']
    #allocation8 [shape = 'u8[4096]{0}', space=vmem, size = 0x1000, scoped, tag = 'output window, operand 1, single buffered']
    #allocation9 [shape = 's32[1]{0}', space=sflag, size = 0x4, scoped, tag = 'scoped memory for tpu_custom_call.1']
    %9 = vsyncpa [#allocation3], 0
    %10 = vsyncpa [#allocation6], 0
    %11 = vsyncpa [#allocation4], 0
    %12 = vsyncpa [#allocation9], 0
    // Predicated region
    $region2: #{tpu_custom_call.1} parent=1 // pred_check
      _
    $region3: #{tpu_custom_call.1} parent=1 // pred_check_branch
      %14 = sbr.rel (0) target = $region5
    $region4: #{tpu_custom_call.1} parent=1 // pred_region
      %s15 = sadd.s32 0, 0
      %p16 = scmp.lt.s32.totalorder %s15, 0
      %s17 = scalar_select %p16, %s15, 0
      %s18 = smul.u32 2, %s17
      %20 = vsyncadd [#allocation3], 0
      %s21 = smul.addr %s18, 8
      %s22 = scalar_lea.hbm %s0, %s21
      %s23 = sshll.u32 %s22, 4
      %s24 = int_to_ptr.hbm [resolvable:$true] %s23
      %s25 = sshll.u32 [#allocation2], 4
      %s26 = int_to_ptr.vmem [resolvable:$true] %s25
      %31 = dma.hbm_to_vmem [thread:$0]  %s24, 256, %s26, [#allocation3], 128, 128, 8
    $region5: #{tpu_custom_call.1} parent=1 // pred_fallthru
      _
    // Predicated region
    $region6: #{tpu_custom_call.1} parent=1 // pred_check
      _
    $region7: #{tpu_custom_call.1} parent=1 // pred_check_branch
      %33 = sbr.rel (0) target = $region9
    $region8: #{tpu_custom_call.1} parent=1 // pred_region
      %s34 = sadd.s32 0, 0
      %p35 = scmp.lt.s32.totalorder %s34, 0
      %s36 = scalar_select %p35, %s34, 0
      %s37 = smul.u32 2, %s36
      %39 = vsyncadd [#allocation6], 0
      %s40 = smul.addr %s37, 8
      %s41 = scalar_lea.hbm %s1, %s40
      %s42 = sshll.u32 %s41, 4
      %s43 = int_to_ptr.hbm [resolvable:$true] %s42
      %s44 = sshll.u32 [#allocation5], 4
      %s45 = int_to_ptr.vmem [resolvable:$true] %s44
      %50 = dma.hbm_to_vmem [thread:$0]  %s43, 256, %s45, [#allocation6], 128, 128, 8
    $region9: #{tpu_custom_call.1} parent=1 // pred_fallthru
      _
    // Predicated region
    $region10: #{tpu_custom_call.1} parent=1 // pred_check
      _
    $region11: #{tpu_custom_call.1} parent=1 // pred_check_branch
      %52 = sbr.rel (0) target = $region13
    $region12: #{tpu_custom_call.1} parent=1 // pred_region
      %54 = dma.done [#allocation3], 256
    $region13: #{tpu_custom_call.1} parent=1 // pred_fallthru
      _
    // Predicated region
    $region14: #{tpu_custom_call.1} parent=1 // pred_check
      _
    $region15: #{tpu_custom_call.1} parent=1 // pred_check_branch
      %56 = sbr.rel (0) target = $region17
    $region16: #{tpu_custom_call.1} parent=1 // pred_region
      %58 = dma.done [#allocation6], 256
    $region17: #{tpu_custom_call.1} parent=1 // pred_fallthru
      _
    %s59 = sadd.s32 0, 0
    %p60 = scmp.lt.s32.totalorder %s59, 0
    %s61 = scalar_select %p60, %s59, 0
    %s62 = smul.u32 2, %s61
    %s63 = sadd.s32 0, 0
    %p64 = scmp.lt.s32.totalorder %s63, 0
    %s65 = scalar_select %p64, %s63, 0
    %s66 = smul.u32 2, %s65
    %p67 = scmp.eq.s32.totalorder 0, 0
    // Predicated region
    $region18: #{tpu_custom_call.1} parent=1 // pred_check
      %p68 = pneg %p67
    $region19: #{tpu_custom_call.1} parent=1 // pred_check_branch
      %70 = sbr.rel (%p68) target = $region21
    $region20: #{tpu_custom_call.1} parent=1 // pred_region
      %71 = vst [vmem:[#allocation7] sm:$0xff] 0.0
      %72 = vst [vmem:[#allocation8] sm:$0xff] 0.0
    $region21: #{tpu_custom_call.1} parent=1 // pred_fallthru
      _
    %v73 = vld [vmem:[#allocation2] sm:$0xff]
    %v74 = vld [vmem:[#allocation2 + $0x8] sm:$0xff]
    %v75 = vld [vmem:[#allocation5] sm:$0xff]
    %v76 = vld [vmem:[#allocation5 + $0x8] sm:$0xff]
    %v77 = vsub.f32 %v73, %v75
    %v78 = vsub.f32 %v74, %v76
    %v79 = vmul.f32 %v77, %v77
    %v80 = vmul.f32 %v78, %v78
    %v81 = vadd.f32 %v77, 0.01
    %v82 = vadd.f32 %v78, 0.01
    %v83 = vmax.f32 %v81, 0.0
    %v84 = vmax.f32 %v82, 0.0
    %v85 = vld [vmem:[#allocation7] sm:$0xff]
    %v86 = vadd.f32 %v79, %v80
    %v87 = vadd.f32 %v85, %v86
    %88 = vst [vmem:[#allocation7] sm:$0xff] %v87
    %v89 = vld [vmem:[#allocation8] sm:$0xff]
    %v90 = vadd.f32 %v83, %v84
    %v91 = vadd.f32 %v89, %v90
    %92 = vst [vmem:[#allocation8] sm:$0xff] %v91
    // Predicated region
    $region22: #{tpu_custom_call.1} parent=1 // pred_check
      _
    $region23: #{tpu_custom_call.1} parent=1 // pred_check_branch
      %94 = sbr.rel (0) target = $region25
    $region24: #{tpu_custom_call.1} parent=1 // pred_region
      %96 = vsyncadd [#allocation4], 0
      %s98 = sshll.u32 [#allocation7], 4
      %s99 = int_to_ptr.vmem [resolvable:$true] %s98
      %s100 = sshll.u32 %s2, 4
      %s101 = int_to_ptr.hbm [resolvable:$true] %s100
      %103 = dma.vmem_to_hbm [thread:$0]  %s99, 128, %s101, [#allocation4]
    $region25: #{tpu_custom_call.1} parent=1 // pred_fallthru
      _
    // Predicated region
    $region26: #{tpu_custom_call.1} parent=1 // pred_check
      _
    $region27: #{tpu_custom_call.1} parent=1 // pred_check_branch
      %105 = sbr.rel (0) target = $region29
    $region28: #{tpu_custom_call.1} parent=1 // pred_region
      %107 = vsyncadd [#allocation9], 0
      %s109 = sshll.u32 [#allocation8], 4
      %s110 = int_to_ptr.vmem [resolvable:$true] %s109
      %s111 = sshll.u32 %s3, 4
      %s112 = int_to_ptr.hbm [resolvable:$true] %s111
      %114 = dma.vmem_to_hbm [thread:$0]  %s110, 128, %s112, [#allocation9]
    $region29: #{tpu_custom_call.1} parent=1 // pred_fallthru
      _
    // Predicated region
    $region30: #{tpu_custom_call.1} parent=1 // pred_check
      _
    $region31: #{tpu_custom_call.1} parent=1 // pred_check_branch
      %116 = sbr.rel (0) target = $region33
    $region32: #{tpu_custom_call.1} parent=1 // pred_region
      %118 = dma.done [#allocation4], 128
    $region33: #{tpu_custom_call.1} parent=1 // pred_fallthru
      _
    // Predicated region
    $region34: #{tpu_custom_call.1} parent=1 // pred_check
      _
    $region35: #{tpu_custom_call.1} parent=1 // pred_check_branch
      %120 = sbr.rel (0) target = $region37
    $region36: #{tpu_custom_call.1} parent=1 // pred_region
      %122 = dma.done [#allocation9], 128
    $region37: #{tpu_custom_call.1} parent=1 // pred_fallthru
      _
    %123 = vsyncpa [#allocation3], 1
    %124 = vsyncpa [#allocation6], 1
    %125 = vsyncpa [#allocation4], 1
    %126 = vsyncpa [#allocation9], 1

</llo_original>
